<compile_context>
chip_gen: v7x
topology: tpu7x:2x2x1
jax: 0.10.0
libtpu: 0.0.40
codegen_flags: <defaults>
</compile_context>

<pallas_src>
import functools

import jax
import jax.numpy as jnp
import numpy as np
from jax.experimental import pallas as pl
from jax.experimental.pallas import tpu as pltpu


def gp_head_kernel(x_ref, w_ref, b_ref, mu_ref, sigma_ref, *, embed_dim):
    # x_ref: (TM, D); w_ref: (D, 2E) = [W_mu | W_logvar]; b_ref: (1, 2E) f32.
    y = jnp.dot(x_ref[...], w_ref[...], preferred_element_type=jnp.float32)
    y = y + b_ref[...]
    mu_ref[...] = y[:, :embed_dim].astype(mu_ref.dtype)
    # diag(RBF(x, x)) == exp(0) == 1 exactly, so sigma_adjusted == sigma.
    # exp only touches the logvar half of the fused matmul output.
    sigma_ref[...] = jnp.exp(0.5 * y[:, embed_dim:]).astype(sigma_ref.dtype)


def fuse_gp_head_params(w_mu, b_mu, w_lv, b_lv):
    """Fuse the two linear heads once at setup time (not per forward call)."""
    w = jnp.concatenate([w_mu, w_lv], axis=1)                       # (D, 2E)
    b = jnp.concatenate([jnp.reshape(b_mu, (1, -1)),
                         jnp.reshape(b_lv, (1, -1))], axis=1)       # (1, 2E)
    return w, b.astype(jnp.float32)


def _tensorcores_per_chip():
    # Best effort: only v7x has 2 TensorCores per chip.
    try:
        kind = str(getattr(jax.devices()[0], "device_kind", "")).lower()
        if "v7" in kind:
            return 2
    except Exception:
        pass
    return 1


def gp_embedding_head(x, w_fused, b_fused, rbf_sigma=1.0, *,
                      row_tile=512, use_bf16=False):
    """x: (B, N, D); w_fused: (D, 2E); b_fused: (1, 2E) -> (mu, sigma_adjusted)."""
    del rbf_sigma  # diag(RBF(x, x)) == exp(0) == 1 regardless of sigma.
    B, N, D = x.shape
    E = w_fused.shape[1] // 2
    M = B * N

    x2 = x.reshape(M, D)
    if use_bf16:
        x2 = x2.astype(jnp.bfloat16)
        w_fused = w_fused.astype(jnp.bfloat16)
    else:
        x2 = x2.astype(jnp.float32)
        w_fused = w_fused.astype(jnp.float32)

    # Row tile: multiple of 8, <= row_tile.  No padding: Pallas masks the
    # ragged last block (writes past M are discarded).
    m8 = ((M + 7) // 8) * 8
    tm = max(8, (min(row_tile, m8) // 8) * 8)
    n_tc = _tensorcores_per_chip()
    if n_tc > 1 and M > 8:
        # Give each TensorCore at least one grid step (v7x only).
        tm = min(tm, max(8, ((pl.cdiv(M, n_tc) + 7) // 8) * 8))
    grid = (pl.cdiv(M, tm),)

    # VMEM budget: double-buffered x tile + fused weight + bias + two f32 outs.
    elt_in = 2 if use_bf16 else 4
    lane = 128
    tile_bytes = (2 * tm * max(D, lane) * elt_in
                  + 2 * max(D, 8) * max(2 * E, lane) * elt_in
                  + 2 * 8 * max(2 * E, lane) * 4
                  + 2 * 2 * tm * max(E, lane) * 4)
    vmem_limit = int(min(64 << 20, max(2 * tile_bytes + (4 << 20), 16 << 20)))

    kernel = functools.partial(gp_head_kernel, embed_dim=E)

    mu, sigma = pl.pallas_call(
        kernel,
        out_shape=(jax.ShapeDtypeStruct((M, E), jnp.float32),
                   jax.ShapeDtypeStruct((M, E), jnp.float32)),
        grid_spec=pltpu.PrefetchScalarGridSpec(
            num_scalar_prefetch=0,
            grid=grid,
            in_specs=[
                pl.BlockSpec((tm, D), lambda i: (i, 0)),        # x row tile
                pl.BlockSpec((D, 2 * E), lambda i: (0, 0)),     # fused weight
                pl.BlockSpec((1, 2 * E), lambda i: (0, 0)),     # fused bias
            ],
            out_specs=[
                pl.BlockSpec((tm, E), lambda i: (i, 0)),        # mu
                pl.BlockSpec((tm, E), lambda i: (i, 0)),        # sigma_adjusted
            ],
        ),
        compiler_params=pltpu.CompilerParams(
            dimension_semantics=("parallel",),
            vmem_limit_bytes=vmem_limit),
    )(x2, w_fused, b_fused)

    return mu.reshape(B, N, E), sigma.reshape(B, N, E)


def reference(x, w_mu, b_mu, w_lv, b_lv, rbf_sigma=1.0):
    mu = jnp.einsum("bnd,de->bne", x, w_mu) + b_mu
    logvar = jnp.einsum("bnd,de->bne", x, w_lv) + b_lv
    sigma = jnp.exp(0.5 * logvar)
    dist = jnp.sum((x[:, :, None, :] - x[:, None, :, :]) ** 2, axis=-1)
    cov = jnp.exp(-dist / (2.0 * rbf_sigma ** 2))
    cov_diag = jnp.diagonal(cov, axis1=1, axis2=2)
    return mu, sigma * cov_diag[..., None]


if __name__ == "__main__":
    B, N, IN_DIM, EMBED_DIM = 2, 8, 32, 16
    RBF_SIGMA = 1.0

    key = jax.random.PRNGKey(0)
    kx, kwm, kbm, kwl, kbl = jax.random.split(key, 5)

    x = jax.random.normal(kx, (B, N, IN_DIM), dtype=jnp.float32)
    # nn.Linear weights are (out, in); pass them pre-transposed as (in, out).
    bound = 1.0 / np.sqrt(IN_DIM)
    w_mu = jax.random.uniform(kwm, (IN_DIM, EMBED_DIM), jnp.float32, -bound, bound)
    b_mu = jax.random.uniform(kbm, (1, EMBED_DIM), jnp.float32, -bound, bound)
    w_lv = jax.random.uniform(kwl, (IN_DIM, EMBED_DIM), jnp.float32, -bound, bound)
    b_lv = jax.random.uniform(kbl, (1, EMBED_DIM), jnp.float32, -bound, bound)

    # Fuse once at "parameter setup" time (not inside the per-call path).
    w_fused, b_fused = fuse_gp_head_params(w_mu, b_mu, w_lv, b_lv)

    mu, sigma_adj = gp_embedding_head(x, w_fused, b_fused, RBF_SIGMA)
    jax.block_until_ready((mu, sigma_adj))

    mu_ref, sig_ref = reference(x, w_mu, b_mu, w_lv, b_lv, RBF_SIGMA)
    np.testing.assert_allclose(np.asarray(mu), np.asarray(mu_ref),
                               rtol=1e-5, atol=1e-5)
    np.testing.assert_allclose(np.asarray(sigma_adj), np.asarray(sig_ref),
                               rtol=1e-5, atol=1e-5)

    # Optional bf16-matmul fast path (looser tolerance; exp amplifies error).
    mu_bf, sig_bf = gp_embedding_head(x, w_fused, b_fused, RBF_SIGMA,
                                      use_bf16=True)
    jax.block_until_ready((mu_bf, sig_bf))
    np.testing.assert_allclose(np.asarray(mu_bf), np.asarray(mu_ref),
                               rtol=1e-1, atol=1e-1)
    np.testing.assert_allclose(np.asarray(sig_bf), np.asarray(sig_ref),
                               rtol=1e-1, atol=1e-1)

    print("KERNEL_OK")
</pallas_src>

<mosaic_0001>
module attributes {stable_mosaic.version = 11 : i64} {
  func.func @gp_head_kernel(%arg0: i32, %arg1: memref<16x32xf32, #tpu.memory_space<vmem>>, %arg2: memref<32x32xf32, #tpu.memory_space<vmem>>, %arg3: memref<1x32xf32, #tpu.memory_space<vmem>>, %arg4: memref<16x16xf32, #tpu.memory_space<vmem>>, %arg5: memref<16x16xf32, #tpu.memory_space<vmem>>) attributes {dimension_semantics = [#tpu.dimension_semantics<parallel>], iteration_bounds = array<i64: 1>, scalar_prefetch = 0 : i64, scratch_operands = 0 : i64, tpu.core_type = #tpu.core_type<tc>, window_params = [{transform_indices = @transform_0, window_bounds = array<i64: 16, 32>}, {pipeline_mode = #tpu.pipeline_mode<synchronous>, transform_indices = @transform_1, window_bounds = array<i64: 32, 32>}, {pipeline_mode = #tpu.pipeline_mode<synchronous>, transform_indices = @transform_2, window_bounds = array<i64: 1, 32>}, {transform_indices = @transform_3, window_bounds = array<i64: 16, 16>}, {transform_indices = @transform_4, window_bounds = array<i64: 16, 16>}]} {
    %c0 = arith.constant 0 : index
    %c0_0 = arith.constant 0 : index
    %0 = vector.load %arg1[%c0, %c0_0] : memref<16x32xf32, #tpu.memory_space<vmem>>, vector<16x32xf32>
    %c0_1 = arith.constant 0 : index
    %c0_2 = arith.constant 0 : index
    %1 = vector.load %arg2[%c0_1, %c0_2] : memref<32x32xf32, #tpu.memory_space<vmem>>, vector<32x32xf32>
    %cst = arith.constant dense<0.000000e+00> : vector<16x32xf32>
    %2 = tpu.matmul %0, %1, %cst {dimension_numbers = #tpu.dot_dimension_numbers<[1], [0], [0], [1], [0, 0, 1, 1], [], []>} : vector<16x32xf32>, vector<32x32xf32>, vector<16x32xf32> -> vector<16x32xf32>
    %c0_3 = arith.constant 0 : index
    %c0_4 = arith.constant 0 : index
    %3 = vector.load %arg3[%c0_3, %c0_4] : memref<1x32xf32, #tpu.memory_space<vmem>>, vector<1x32xf32>
    %4 = vector.broadcast %3 : vector<1x32xf32> to vector<16x32xf32>
    %5 = arith.addf %2, %4 : vector<16x32xf32>
    %6 = vector.extract_strided_slice %5 {offsets = [0, 0], sizes = [16, 16], strides = [1, 1]} : vector<16x32xf32> to vector<16x16xf32>
    %c0_5 = arith.constant 0 : index
    %c0_6 = arith.constant 0 : index
    %7 = vector.load %arg4[%c0_5, %c0_6] : memref<16x16xf32, #tpu.memory_space<vmem>>, vector<16x16xf32>
    tpu.vector_store %arg4[%c0_5, %c0_6], %6 {strides = array<i32>} : memref<16x16xf32, #tpu.memory_space<vmem>>, vector<16x16xf32>,
    %8 = vector.extract_strided_slice %5 {offsets = [0, 16], sizes = [16, 16], strides = [1, 1]} : vector<16x32xf32> to vector<16x16xf32>
    %cst_7 = arith.constant 5.000000e-01 : f32
    %9 = vector.broadcast %cst_7 : f32 to vector<16x16xf32>
    %10 = arith.mulf %9, %8 : vector<16x16xf32>
    %11 = math.exp %10 : vector<16x16xf32>
    %c0_8 = arith.constant 0 : index
    %c0_9 = arith.constant 0 : index
    %12 = vector.load %arg5[%c0_8, %c0_9] : memref<16x16xf32, #tpu.memory_space<vmem>>, vector<16x16xf32>
    tpu.vector_store %arg5[%c0_8, %c0_9], %11 {strides = array<i32>} : memref<16x16xf32, #tpu.memory_space<vmem>>, vector<16x16xf32>,
    return
  }
  func.func @transform_0(%arg0: i32) -> (i32, i32) {
    %c0_i32 = arith.constant 0 : i32
    %c0_i32_0 = arith.constant 0 : i32
    return %arg0, %c0_i32 : i32, i32
  }
  func.func @transform_1(%arg0: i32) -> (i32, i32) {
    %c0_i32 = arith.constant 0 : i32
    %c0_i32_0 = arith.constant 0 : i32
    %c0_i32_1 = arith.constant 0 : i32
    return %c0_i32, %c0_i32_0 : i32, i32
  }
  func.func @transform_2(%arg0: i32) -> (i32, i32) {
    %c0_i32 = arith.constant 0 : i32
    %c0_i32_0 = arith.constant 0 : i32
    %c0_i32_1 = arith.constant 0 : i32
    return %c0_i32, %c0_i32_0 : i32, i32
  }
  func.func @transform_3(%arg0: i32) -> (i32, i32) {
    %c0_i32 = arith.constant 0 : i32
    %c0_i32_0 = arith.constant 0 : i32
    return %arg0, %c0_i32 : i32, i32
  }
  func.func @transform_4(%arg0: i32) -> (i32, i32) {
    %c0_i32 = arith.constant 0 : i32
    %c0_i32_0 = arith.constant 0 : i32
    return %arg0, %c0_i32 : i32, i32
  }
}

</mosaic_0001>

<llo_original>
// kernel: tpu_custom_call.1
$region0: #{tpu_custom_call.1}
  #allocation0 [shape = 'u32[]', space=smem, size = 0x4, offset = 0x4, fixed_abs, tag = 'smem constant byte address 0x4 - core index']
  #allocation1 [shape = 'u32[144,128]{1,0:T(1,128)}', space=vmem, size = 0x12000, scoped, tag = 'internal scratch']
  %s0 = inlined_call_operand.hbm [shape: f32[16,32], index: 0, kind: input, shape index: {}]
  %s1 = inlined_call_operand.hbm [shape: f32[32,32], index: 1, kind: input, shape index: {}]
  %s2 = inlined_call_operand.vmem [shape: f32[1,32], index: 2, kind: input, shape index: {}]
  %s3 = inlined_call_operand.hbm [shape: f32[16,16], index: 3, kind: output, shape index: {0}]
  %s4 = inlined_call_operand.hbm [shape: f32[16,16], index: 4, kind: output, shape index: {1}]
  %5 = xla_tuple %s3, %s4
  %s6 = sld [smem:[#allocation0]]
  $region38: #{tpu_custom_call.1} parent=0
    _
  %s8 = ssub.s32 1, %s6
  %s9 = scalar_select 0, %s8, %s6
  $region1: #{tpu_custom_call.1} parent=0
    #allocation2 [shape = 'u8[8192]{0}', space=vmem, size = 0x2000, scoped, tag = 'input window, operand 0, single buffered']
    #allocation3 [shape = 's32[1]{0}', space=sflag, size = 0x4, scoped, tag = 'scoped memory for tpu_custom_call.1']
    #allocation4 [shape = 's32[1]{0}', space=sflag, size = 0x4, scoped, tag = 'scoped memory for tpu_custom_call.1']
    #allocation5 [shape = 'u8[16384]{0}', space=vmem, size = 0x4000, scoped, tag = 'input window, operand 1, single buffered']
    #allocation6 [shape = 's32[1]{0}', space=sflag, size = 0x4, scoped, tag = 'scoped memory for tpu_custom_call.1']
    #allocation7 [shape = 'u8[8192]{0}', space=vmem, size = 0x2000, scoped, tag = 'output window, operand 0, single buffered']
    #allocation8 [shape = 'u8[8192]{0}', space=vmem, size = 0x2000, scoped, tag = 'output window, operand 1, single buffered']
    #allocation9 [shape = 's32[1]{0}', space=sflag, size = 0x4, scoped, tag = 'scoped memory for tpu_custom_call.1']
    %10 = vsyncpa [#allocation3], 0
    %11 = vsyncpa [#allocation6], 0
    %12 = vsyncpa [#allocation4], 0
    %13 = vsyncpa [#allocation9], 0
    // Predicated region
    $region2: #{tpu_custom_call.1} parent=1 // pred_check
      _
    $region3: #{tpu_custom_call.1} parent=1 // pred_check_branch
      %15 = sbr.rel (0) target = $region5
    $region4: #{tpu_custom_call.1} parent=1 // pred_region
      %s17 = ssub.s32 256, 256
      %18 = vsyncadd [#allocation3], %s17
      %s19 = sshll.u32 [#allocation2], 4
      %s20 = int_to_ptr.vmem [resolvable:$true] %s19
      %25 = dma.hbm_to_vmem [thread:$0]  %s0, 256, %s20, [#allocation3], 128, 128, 8
    $region5: #{tpu_custom_call.1} parent=1 // pred_fallthru
      _
    // Predicated region
    $region6: #{tpu_custom_call.1} parent=1 // pred_check
      _
    $region7: #{tpu_custom_call.1} parent=1 // pred_check_branch
      %27 = sbr.rel (0) target = $region9
    $region8: #{tpu_custom_call.1} parent=1 // pred_region
      %s29 = ssub.s32 512, 512
      %30 = vsyncadd [#allocation6], %s29
      %s31 = sshll.u32 [#allocation5], 4
      %s32 = int_to_ptr.vmem [resolvable:$true] %s31
      %37 = dma.hbm_to_vmem [thread:$0]  %s1, 512, %s32, [#allocation6], 128, 128, 8
    $region9: #{tpu_custom_call.1} parent=1 // pred_fallthru
      _
    // Predicated region
    $region10: #{tpu_custom_call.1} parent=1 // pred_check
      _
    $region11: #{tpu_custom_call.1} parent=1 // pred_check_branch
      %39 = sbr.rel (0) target = $region13
    $region12: #{tpu_custom_call.1} parent=1 // pred_region
      _
    $region13: #{tpu_custom_call.1} parent=1 // pred_fallthru
      _
    // Predicated region
    $region14: #{tpu_custom_call.1} parent=1 // pred_check
      _
    $region15: #{tpu_custom_call.1} parent=1 // pred_check_branch
      %41 = sbr.rel (0) target = $region17
    $region16: #{tpu_custom_call.1} parent=1 // pred_region
      %42 = dma.done [#allocation3], 256
    $region17: #{tpu_custom_call.1} parent=1 // pred_fallthru
      _
    // Predicated region
    $region18: #{tpu_custom_call.1} parent=1 // pred_check
      _
    $region19: #{tpu_custom_call.1} parent=1 // pred_check_branch
      %44 = sbr.rel (0) target = $region21
    $region20: #{tpu_custom_call.1} parent=1 // pred_region
      %45 = dma.done [#allocation6], 512
    $region21: #{tpu_custom_call.1} parent=1 // pred_fallthru
      _
    %v46 = vld [vmem:[#allocation2] sm:$0xff]
    %v47 = vld [vmem:[#allocation2 + $0x8] sm:$0xff]
    %v48 = vld [vmem:[#allocation5] sm:$0xff]
    %v49 = vld [vmem:[#allocation5 + $0x8] sm:$0xff]
    %v50 = vld [vmem:[#allocation5 + $0x10] sm:$0xff]
    %v51 = vld [vmem:[#allocation5 + $0x18] sm:$0xff]
    %v52 = vld [vmem:[%s2] sm:$0x1]
    %v54 = vlaneseq
    %v55 = vshrl.u32 %v54, 7
    %v56 = vsub.s32 0, %v55
    %v57 = vrot.slane %v52, %v56
    %vm59 = vcmask 261120
    %v61 = vsel %vm59, %v46, 0
    %v64 = vsel %vm59, %v47, 0
    %66 = vmatprep.subr.mxu0 0.0
    %67 = vmatpush1.msra.mxu0 %v48
    %68 = vmatprep.subr.mxu0 0.0
    %69 = vmatpush1.msra.mxu0 %v49
    %70 = vmatprep.subr.mxu0 0.0
    %71 = vmatpush1.msra.mxu0 %v50
    %72 = vmatprep.subr.mxu0 0.0
    %73 = vmatpush1.msra.mxu0 %v51
    %74 = vmatprep.subr.mxu0 0.0
    %75 = vmatpush1.msra.mxu0 0.0
    %76 = vmatprep.subr.mxu0 0.0
    %77 = vmatpush1.msra.mxu0 0.0
    %78 = vmatprep.subr.mxu0 0.0
    %79 = vmatpush1.msra.mxu0 0.0
    %80 = vmatprep.subr.mxu0 0.0
    %81 = vmatpush1.msra.mxu0 0.0
    %82 = vmatprep.subr.mxu0 0.0
    %83 = vmatpush1.msra.mxu0 0.0
    %84 = vmatprep.subr.mxu0 0.0
    %85 = vmatpush1.msra.mxu0 0.0
    %86 = vmatprep.subr.mxu0 0.0
    %87 = vmatpush1.msra.mxu0 0.0
    %88 = vmatprep.subr.mxu0 0.0
    %89 = vmatpush1.msra.mxu0 0.0
    %90 = vmatprep.subr.mxu0 0.0
    %91 = vmatpush1.msra.mxu0 0.0
    %92 = vmatprep.subr.mxu0 0.0
    %93 = vmatpush1.msra.mxu0 0.0
    %94 = vmatprep.subr.mxu0 0.0
    %95 = vmatpush1.msra.mxu0 0.0
    %96 = vmatprep.subr.mxu0 0.0
    %97 = vmatpush1.msra.mxu0 0.0
    %98 = vmatprep.subr.mxu0 0.0
    %99 = vmatpush1.msra.mxu0 0.0
    %100 = vmatprep.subr.mxu0 0.0
    %101 = vmatpush1.msra.mxu0 0.0
    %102 = vmatprep.subr.mxu0 0.0
    %103 = vmatpush1.msra.mxu0 0.0
    %104 = vmatprep.subr.mxu0 0.0
    %105 = vmatpush1.msra.mxu0 0.0
    %106 = vmatprep.subr.mxu0 0.0
    %107 = vmatpush1.msra.mxu0 0.0
    %108 = vmatprep.subr.mxu0 0.0
    %109 = vmatpush1.msra.mxu0 0.0
    %110 = vmatprep.subr.mxu0 0.0
    %111 = vmatpush1.msra.mxu0 0.0
    %112 = vmatprep.subr.mxu0 0.0
    %113 = vmatpush1.msra.mxu0 0.0
    %114 = vmatprep.subr.mxu0 0.0
    %115 = vmatpush1.msra.mxu0 0.0
    %116 = vmatprep.subr.mxu0 0.0
    %117 = vmatpush1.msra.mxu0 0.0
    %118 = vmatprep.subr.mxu0 0.0
    %119 = vmatpush1.msra.mxu0 0.0
    %120 = vmatprep.subr.mxu0 0.0
    %121 = vmatpush1.msra.mxu0 0.0
    %122 = vmatprep.subr.mxu0 0.0
    %123 = vmatpush1.msra.mxu0 0.0
    %124 = vmatprep.subr.mxu0 0.0
    %125 = vmatpush1.msra.mxu0 0.0
    %126 = vmatprep.subr.mxu0 0.0
    %127 = vmatpush1.msra.mxu0 0.0
    %128 = vmatprep.subr.mxu0 0.0
    %129 = vmatpush1.msra.mxu0 0.0
    %130 = vmatprep.mubr.f32.mxu0 0.0
    %131 = vmatmul.mubr.f32.gmra.mrb[0].mxu0 %v61
    %v132 = vpop.f32.mrb[0].mxu0
    %v133 = vadd.f32 %v57, %v132
    %v134 = vpop.f32.mrb[0].mxu0
    %135 = vmatprep.mubr.f32.mxu0 0.0
    %136 = vmatmul.mubr.f32.gmra.mrb[0].mxu0 %v64
    %v137 = vpop.f32.mrb[0].mxu0
    %v138 = vadd.f32 %v57, %v137
    %v139 = vpop.f32.mrb[0].mxu0
    %140 = vdwg.mxu0
    %vm141 = vcmask 130048
    %142 = vst.msk [vmem:[#allocation7] sm:$0xff] %vm141, %v133
    %143 = vst.msk [vmem:[#allocation7 + $0x8] sm:$0xff] %vm141, %v138
    %v144 = vmul.f32 %v133, 0.5
    %v145 = vmul.f32 %v138, 0.5
    %v146 = vmul.f32 %v144, 1.442695
    %v147 = vpow.pop %v146
    %v148 = vmul.f32 %v145, 1.442695
    %v149 = vpow.pop %v148
    %152 = vrot.lane.b32.xlu0 %v147, 112
    %v153 = vpop.permute.xlu0 %152
    %154 = vrot.lane.b32.xlu0 %v149, 112
    %v155 = vpop.permute.xlu0 %154
    %158 = vst.msk [vmem:[#allocation8] sm:$0xff] %vm141, %v153
    %159 = vst.msk [vmem:[#allocation8 + $0x8] sm:$0xff] %vm141, %v155
    // Predicated region
    $region22: #{tpu_custom_call.1} parent=1 // pred_check
      _
    $region23: #{tpu_custom_call.1} parent=1 // pred_check_branch
      %161 = sbr.rel (0) target = $region25
    $region24: #{tpu_custom_call.1} parent=1 // pred_region
      %s163 = ssub.s32 256, 256
      %164 = vsyncadd [#allocation4], %s163
      %s165 = sshll.u32 [#allocation7], 4
      %s166 = int_to_ptr.vmem [resolvable:$true] %s165
      %171 = dma.vmem_to_hbm [thread:$0]  %s166, 256, %s3, [#allocation4], 128, 128, 8
    $region25: #{tpu_custom_call.1} parent=1 // pred_fallthru
      _
    // Predicated region
    $region26: #{tpu_custom_call.1} parent=1 // pred_check
      _
    $region27: #{tpu_custom_call.1} parent=1 // pred_check_branch
      %173 = sbr.rel (0) target = $region29
    $region28: #{tpu_custom_call.1} parent=1 // pred_region
      %s175 = ssub.s32 256, 256
      %176 = vsyncadd [#allocation9], %s175
      %s177 = sshll.u32 [#allocation8], 4
      %s178 = int_to_ptr.vmem [resolvable:$true] %s177
      %183 = dma.vmem_to_hbm [thread:$0]  %s178, 256, %s4, [#allocation9], 128, 128, 8
    $region29: #{tpu_custom_call.1} parent=1 // pred_fallthru
      _
    // Predicated region
    $region30: #{tpu_custom_call.1} parent=1 // pred_check
      _
    $region31: #{tpu_custom_call.1} parent=1 // pred_check_branch
      %185 = sbr.rel (0) target = $region33
    $region32: #{tpu_custom_call.1} parent=1 // pred_region
      %186 = dma.done [#allocation4], 256
    $region33: #{tpu_custom_call.1} parent=1 // pred_fallthru
      _
    // Predicated region
    $region34: #{tpu_custom_call.1} parent=1 // pred_check
      _
    $region35: #{tpu_custom_call.1} parent=1 // pred_check_branch
      %188 = sbr.rel (0) target = $region37
    $region36: #{tpu_custom_call.1} parent=1 // pred_region
      %189 = dma.done [#allocation9], 256
    $region37: #{tpu_custom_call.1} parent=1 // pred_fallthru
      _
    %190 = vsyncpa [#allocation3], 1
    %191 = vsyncpa [#allocation6], 1
    %192 = vsyncpa [#allocation4], 1
    %193 = vsyncpa [#allocation9], 1

</llo_original>
